<compile_context>
chip_gen: v5e
topology: v5e:2x2
jax: 0.10.0
libtpu: 0.0.40
codegen_flags: <defaults>
</compile_context>

<pallas_src>
import math

import jax
import jax.numpy as jnp
from jax.experimental import pallas as pl
from jax.experimental.pallas import tpu as pltpu


# ----------------------------------------------------------------------------
# Kernel: single HBM -> HBM DMA copy (no grid, no VMEM staging).
# ----------------------------------------------------------------------------
def _flatten_copy_kernel(x_hbm_ref, o_hbm_ref, sem):
    cp = pltpu.make_async_copy(x_hbm_ref, o_hbm_ref, sem)
    cp.start()
    cp.wait()


# ----------------------------------------------------------------------------
# Wrapper (mirrors Flatten(dim).forward)
# ----------------------------------------------------------------------------
def pallas_flatten(x, dim=1):
    """Pallas implementation of Flatten(dim).forward(x)."""
    lead = tuple(int(s) for s in x.shape[:dim])
    total = int(math.prod(x.shape)) if x.ndim else 1
    b = int(math.prod(lead)) if lead else 1
    n = total // b
    out_shape = (*lead, n)

    # Metadata-only view of the contiguous input in the flattened layout; the
    # kernel then does one whole-buffer HBM -> HBM DMA into the output.
    x_flat = jnp.reshape(x, out_shape)

    out = pl.pallas_call(
        _flatten_copy_kernel,
        out_shape=jax.ShapeDtypeStruct(out_shape, x.dtype),
        in_specs=[pl.BlockSpec(memory_space=pl.ANY)],
        out_specs=pl.BlockSpec(memory_space=pl.ANY),
        scratch_shapes=[pltpu.SemaphoreType.DMA(())],
    )(x_flat)

    return out


# ----------------------------------------------------------------------------
# Self-test
# ----------------------------------------------------------------------------
if __name__ == "__main__":
    key = jax.random.PRNGKey(0)

    cases = [
        ((2, 4, 16, 16), jnp.float32, 1),   # required example shape
        ((16, 8, 32, 32), jnp.bfloat16, 1),  # larger, sub-32-bit dtype
        ((4, 5, 12, 12), jnp.float32, 1),    # N = 720, not a multiple of 128
        ((2, 4, 16, 16), jnp.float32, 2),    # flatten at dim=2
    ]

    for shape, dtype, dim in cases:
        key, sub = jax.random.split(key)
        x = jax.random.normal(sub, shape, dtype=jnp.float32).astype(dtype)

        out = jax.block_until_ready(pallas_flatten(x, dim=dim))
        ref = jnp.reshape(x, (*shape[:dim], -1))

        assert out.shape == ref.shape, (shape, dim, out.shape, ref.shape)
        assert out.dtype == ref.dtype, (shape, dim, out.dtype, ref.dtype)
        assert jnp.array_equal(out, ref), (shape, dtype, dim)

    print("KERNEL_OK")
</pallas_src>

<mosaic_0001>
module attributes {stable_mosaic.version = 11 : i64} {
  func.func @_flatten_copy_kernel(%arg0: memref<2x1024xf32, #tpu.memory_space<any>>, %arg1: memref<2x1024xf32, #tpu.memory_space<any>>, %arg2: memref<!tpu.dma_semaphore, #tpu.memory_space<semaphore_mem>>) attributes {dimension_semantics = [], scalar_prefetch = 0 : i64, scratch_operands = 1 : i64, tpu.core_type = #tpu.core_type<tc>} {
    tpu.enqueue_dma source(%arg0 : memref<2x1024xf32, #tpu.memory_space<any>>) target(%arg1 : memref<2x1024xf32, #tpu.memory_space<any>>) target_semaphore(%arg2 : memref<!tpu.dma_semaphore, #tpu.memory_space<semaphore_mem>>)
    tpu.wait_dma2 semaphore(%arg2 : memref<!tpu.dma_semaphore, #tpu.memory_space<semaphore_mem>>) src(%arg0 : memref<2x1024xf32, #tpu.memory_space<any>>) dst(%arg1 : memref<2x1024xf32, #tpu.memory_space<any>>)
    return
  }
}

</mosaic_0001>

<llo_original>
// kernel: tpu_custom_call.1
$region0: #{tpu_custom_call.1}
  #allocation0 [shape = 'u32[]', space=smem, size = 0x4, offset = 0x4, fixed_abs, tag = 'smem constant byte address 0x4 - core index']
  #allocation1 [shape = 'u32[72,128]{1,0:T(1,128)}', space=vmem, size = 0x9000, scoped, tag = 'internal scratch']
  #allocation2 [shape = 's32[1]{0}', space=sflag, size = 0x4, scoped, tag = 'scratch operand']
  #allocation3 [shape = 's32[]', space=sflag, size = 0x4, offset = 0, fixed_abs, tag = 'sflag constant byte address 0x0 - dummy sync flag']
  #allocation4 [shape = 'u32[0]{0}', space=smem, size = 0, offset = 0, fixed_abs, tag = 'smem constant byte address 0x0 - null']
  %s0 = inlined_call_operand.hbm [shape: f32[2,1024], index: 0, kind: input, shape index: {}]
  %s1 = inlined_call_operand.hbm [shape: f32[2,1024], index: 1, kind: output, shape index: {}]
  %s2 = sld [smem:[#allocation0]]
  $region2: #{tpu_custom_call.1} parent=0
    _
  %s4 = ssub.s32 1, %s2
  %s5 = scalar_select 0, %s4, %s2
  %s7 = sshll.u32 1, 14
  %s8 = sxor.u32 4294967295, %s7
  %s10 = sshll.u32 %s0, 4
  %s11 = int_to_ptr.hbm [resolvable:$true] %s10
  %s12 = sshll.u32 %s1, 4
  %s13 = int_to_ptr.hbm [resolvable:$true] %s12
  %16 = dma.general %s11, 256, %s13, [#allocation2], [#allocation3], [#allocation4], 0, 0
  %s17 = smul.u32 2, 1
  %s18 = smul.u32 %s17, 8
  %s19 = sshll.u32 %s18, 4
  %20 = dma.done [#allocation2], %s19
  %21 = vsyncmov [#allocation2]
  %s22 = vpop.sfrf %21
  %p23 = scmp.eq.s32.totalorder %s22, 0
  %p24 = pneg %p23
  %26 = shalt.err (%p24)

</llo_original>
